<compile_context>
chip_gen: v6e
topology: v6e:2x2x1
jax: 0.10.0
libtpu: 0.0.40
codegen_flags: <defaults>
</compile_context>

<pallas_src>
import jax
import jax.numpy as jnp
from jax.experimental import pallas as pl
from jax.experimental.pallas import tpu as pltpu


def _round_up(v, m):
    return (v + m - 1) // m * m


def _vmem_capacity_bytes():
    """Per-core VMEM capacity; falls back to v7x's 64 MiB (most conservative)."""
    try:
        cap = getattr(pltpu.get_tpu_info(), "vmem_capacity_bytes", None)
        if cap:
            return int(cap)
    except Exception:
        pass
    return 64 << 20


def sage_kernel(x_ref, adj_ref, wt_ref, out_ref):
    # x_ref:   (R, Cin)     node features of this step's graphs, row-stacked
    # adj_ref: (R, R)       block-diagonal adjacency for this step
    # wt_ref:  (Cin, Co_p)  transposed linear weight (constant block index ->
    #                       fetched once and resident across the whole grid)
    # out_ref: (R, Co_p)    lane-dense (Co_p multiple of 128) output slab
    x = x_ref[...]

    # Neighborhood aggregation for all graphs of this step in one MXU matmul.
    ax = jnp.dot(adj_ref[...], x, preferred_element_type=jnp.float32)

    # Fused: (x + adj @ x) @ Wt  (instead of x@Wt + (adj@x)@Wt); add in f32.
    m = x.astype(jnp.float32) + ax

    out = jnp.dot(m.astype(wt_ref.dtype), wt_ref[...],
                  preferred_element_type=jnp.float32)
    out_ref[...] = out.astype(out_ref.dtype)


def sage_conv(x, adj, w, *, compute_dtype=jnp.bfloat16, graphs_per_step=None):
    """
    x:   (N, Cin)  node features, N = B * S
    adj: (B, S, S) dense adjacency per graph
    w:   (Cout, Cin) nn.Linear weight layout (bias=False), shared lin_r
    compute_dtype: MXU operand dtype (None -> x.dtype); accumulation is f32.
    returns: (N, Cout) in x.dtype
    """
    B, S, _ = adj.shape
    N, Cin = x.shape
    assert N == B * S
    Cout = w.shape[0]
    out_dtype = x.dtype
    if compute_dtype is None:
        compute_dtype = x.dtype
    c_isz = jnp.dtype(compute_dtype).itemsize
    o_isz = jnp.dtype(out_dtype).itemsize

    # Sublane packing multiple for the compute dtype (f32: 8, bf16: 16, i8: 32).
    sub = 8 * max(1, 4 // c_isz)
    S_p = _round_up(S, sub)
    Cout_p = _round_up(Cout, 128)      # lane-dense output; Cin left UNpadded

    vmem_usable = (3 * _vmem_capacity_bytes()) // 4   # headroom for Mosaic scratch

    def step_vmem_bytes(bb_):
        r = bb_ * S_p
        blocks = 2 * (r * Cin * c_isz + r * r * c_isz + r * Cout_p * o_isz)  # dbl-buffered
        weight = 2 * Cin * Cout_p * c_isz
        f32_tmp = 4 * r * (2 * Cin + Cout_p)           # ax, m, out intermediates
        return blocks + weight + f32_tmp

    # ---- choose graphs-per-step (bb) ---------------------------------------
    if graphs_per_step is None:
        bb = max(1, min(
            B if B == 1 else B // 2,           # >= 2 grid steps -> both v7x TCs busy
            max(1, 256 // S_p),                # target ~256-row MXU M extent
            max(1, (Cin + Cout_p) // S_p),     # bound block-diag adjacency traffic
        ))
        while bb > 1 and step_vmem_bytes(bb) > vmem_usable:
            bb -= 1
        while B % bb != 0:                     # bb must divide B
            bb -= 1
    else:
        bb = graphs_per_step
        assert B % bb == 0
    R = bb * S_p
    G = B // bb

    # ---- wrapper-side staging (cheap here; pre-pad upstream in a real
    #      pipeline to avoid per-call HBM round trips) ------------------------
    x_p = jnp.pad(x.reshape(B, S, Cin), ((0, 0), (0, S_p - S), (0, 0)))
    x2d = x_p.reshape(B * S_p, Cin).astype(compute_dtype)

    adj_p = jnp.pad(adj, ((0, 0), (0, S_p - S), (0, S_p - S))).astype(compute_dtype)
    if bb == 1:
        adj2d = adj_p.reshape(B * S_p, S_p)
    else:
        # Block-diagonal packing: aggregation for bb graphs becomes ONE
        # (R x R) x (R x Cin) MXU matmul instead of bb tiny ones.
        eye = jnp.eye(bb, dtype=compute_dtype)
        adj_bd = jnp.einsum("gisq,ij->gisjq",
                            adj_p.reshape(G, bb, S_p, S_p), eye)
        adj2d = adj_bd.reshape(G * R, R)

    wt_p = jnp.pad(w.T, ((0, 0), (0, Cout_p - Cout))).astype(compute_dtype)

    flops = 2 * G * R * R * Cin + 2 * B * S_p * Cin * Cout_p
    bytes_accessed = (x2d.size * c_isz + adj2d.size * c_isz
                      + wt_p.size * c_isz + B * S_p * Cout_p * o_isz)
    vmem_limit = int(min(vmem_usable,
                         max(16 << 20, step_vmem_bytes(bb) + (4 << 20))))

    out = pl.pallas_call(
        sage_kernel,
        out_shape=jax.ShapeDtypeStruct((B * S_p, Cout_p), out_dtype),
        grid_spec=pltpu.PrefetchScalarGridSpec(
            num_scalar_prefetch=0,
            grid=(G,),
            in_specs=[
                pl.BlockSpec((R, Cin), lambda g: (g, 0)),
                pl.BlockSpec((R, R), lambda g: (g, 0)),
                # Constant block index -> weight fetched once, stays resident.
                # (Could add pipeline_mode=pl.Buffered(1) to save its second
                # buffer; it is tiny here.)
                pl.BlockSpec((Cin, Cout_p), lambda g: (0, 0)),
            ],
            out_specs=pl.BlockSpec((R, Cout_p), lambda g: (g, 0)),
        ),
        compiler_params=pltpu.CompilerParams(
            dimension_semantics=("parallel",),
            vmem_limit_bytes=vmem_limit),
        cost_estimate=pl.CostEstimate(flops=int(flops), transcendentals=0,
                                      bytes_accessed=int(bytes_accessed)),
    )(x2d, adj2d, wt_p)

    # TODO(synk): for very large S (a full (S_p, S_p) adjacency block no longer
    # fits VMEM, hit first on v7x), add a K-reduction grid axis over adjacency
    # columns with a VMEM f32 accumulator (pl.when init on k==0 / finalize on
    # the last k), placed last in the grid and marked "arbitrary".
    return out.reshape(B, S_p, Cout_p)[:, :S, :Cout].reshape(N, Cout)


def sage_conv_ref(x, adj, w):
    """Pure-JAX reference mirroring the PyTorch forward exactly."""
    B, S, _ = adj.shape
    N, Cin = x.shape
    h1 = x @ w.T
    h2 = jnp.einsum("bij,bjc->bic", adj, x.reshape(B, S, Cin))
    h2 = h2.reshape(N, Cin) @ w.T
    return h1 + h2


if __name__ == "__main__":
    # Small shapes: B=2 graphs, S=8 nodes each, in_channels=16, out_channels=32
    B, S, Cin, Cout = 2, 8, 16, 32
    N = B * S

    key = jax.random.PRNGKey(0)
    kx, ka, kw = jax.random.split(key, 3)

    x = jax.random.normal(kx, (N, Cin), dtype=jnp.float32)
    adj = jax.random.uniform(ka, (B, S, S), dtype=jnp.float32)

    # Deterministic init mimicking nn.Linear.reset_parameters
    # (kaiming_uniform -> uniform in [-1/sqrt(Cin), 1/sqrt(Cin)])
    bound = 1.0 / (Cin ** 0.5)
    w = jax.random.uniform(kw, (Cout, Cin), dtype=jnp.float32,
                           minval=-bound, maxval=bound)

    ref = sage_conv_ref(x, adj, w)

    # Exact f32-MXU run: tight tolerance against the PyTorch-equivalent ref.
    out_f32 = jax.block_until_ready(sage_conv(x, adj, w,
                                              compute_dtype=jnp.float32))
    assert out_f32.shape == (N, Cout)
    assert jnp.allclose(out_f32, ref, atol=1e-4, rtol=1e-5), \
        float(jnp.max(jnp.abs(out_f32 - ref)))

    # Default bf16-operand run (halved DMA bytes, bf16-native MXU, f32 accum):
    # loosened tolerance for the operand quantization.
    out_bf16 = jax.block_until_ready(sage_conv(x, adj, w))
    assert out_bf16.shape == (N, Cout)
    assert jnp.allclose(out_bf16, ref, atol=1e-1, rtol=1e-1), \
        float(jnp.max(jnp.abs(out_bf16 - ref)))

    print("KERNEL_OK")
</pallas_src>

<mosaic_0001>
module attributes {stable_mosaic.version = 11 : i64} {
  func.func @sage_kernel(%arg0: i32, %arg1: memref<8x16xf32, #tpu.memory_space<vmem>>, %arg2: memref<8x8xf32, #tpu.memory_space<vmem>>, %arg3: memref<16x128xf32, #tpu.memory_space<vmem>>, %arg4: memref<8x128xf32, #tpu.memory_space<vmem>>) attributes {dimension_semantics = [#tpu.dimension_semantics<parallel>], iteration_bounds = array<i64: 2>, scalar_prefetch = 0 : i64, scratch_operands = 0 : i64, tpu.core_type = #tpu.core_type<tc>, window_params = [{transform_indices = @transform_0, window_bounds = array<i64: 8, 16>}, {transform_indices = @transform_1, window_bounds = array<i64: 8, 8>}, {pipeline_mode = #tpu.pipeline_mode<synchronous>, transform_indices = @transform_2, window_bounds = array<i64: 16, 128>}, {transform_indices = @transform_3, window_bounds = array<i64: 8, 128>}]} {
    %c0 = arith.constant 0 : index
    %c0_0 = arith.constant 0 : index
    %0 = vector.load %arg1[%c0, %c0_0] : memref<8x16xf32, #tpu.memory_space<vmem>>, vector<8x16xf32>
    %c0_1 = arith.constant 0 : index
    %c0_2 = arith.constant 0 : index
    %1 = vector.load %arg2[%c0_1, %c0_2] : memref<8x8xf32, #tpu.memory_space<vmem>>, vector<8x8xf32>
    %cst = arith.constant dense<0.000000e+00> : vector<8x16xf32>
    %2 = tpu.matmul %1, %0, %cst {dimension_numbers = #tpu.dot_dimension_numbers<[1], [0], [0], [1], [0, 0, 1, 1], [], []>} : vector<8x8xf32>, vector<8x16xf32>, vector<8x16xf32> -> vector<8x16xf32>
    %3 = arith.addf %0, %2 : vector<8x16xf32>
    %c0_3 = arith.constant 0 : index
    %c0_4 = arith.constant 0 : index
    %4 = vector.load %arg3[%c0_3, %c0_4] : memref<16x128xf32, #tpu.memory_space<vmem>>, vector<16x128xf32>
    %cst_5 = arith.constant dense<0.000000e+00> : vector<8x128xf32>
    %5 = tpu.matmul %3, %4, %cst_5 {dimension_numbers = #tpu.dot_dimension_numbers<[1], [0], [0], [1], [0, 0, 1, 1], [], []>} : vector<8x16xf32>, vector<16x128xf32>, vector<8x128xf32> -> vector<8x128xf32>
    %c0_6 = arith.constant 0 : index
    %c0_7 = arith.constant 0 : index
    %6 = vector.load %arg4[%c0_6, %c0_7] : memref<8x128xf32, #tpu.memory_space<vmem>>, vector<8x128xf32>
    tpu.vector_store %arg4[%c0_6, %c0_7], %5 {strides = array<i32>} : memref<8x128xf32, #tpu.memory_space<vmem>>, vector<8x128xf32>,
    return
  }
  func.func @transform_0(%arg0: i32) -> (i32, i32) {
    %c0_i32 = arith.constant 0 : i32
    %c0_i32_0 = arith.constant 0 : i32
    return %arg0, %c0_i32 : i32, i32
  }
  func.func @transform_1(%arg0: i32) -> (i32, i32) {
    %c0_i32 = arith.constant 0 : i32
    %c0_i32_0 = arith.constant 0 : i32
    return %arg0, %c0_i32 : i32, i32
  }
  func.func @transform_2(%arg0: i32) -> (i32, i32) {
    %c0_i32 = arith.constant 0 : i32
    %c0_i32_0 = arith.constant 0 : i32
    %c0_i32_1 = arith.constant 0 : i32
    return %c0_i32, %c0_i32_0 : i32, i32
  }
  func.func @transform_3(%arg0: i32) -> (i32, i32) {
    %c0_i32 = arith.constant 0 : i32
    %c0_i32_0 = arith.constant 0 : i32
    return %arg0, %c0_i32 : i32, i32
  }
}

</mosaic_0001>

<llo_original>
// kernel: tpu_custom_call.1
$region0: #{tpu_custom_call.1}
  #allocation0 [shape = 'u32[]', space=smem, size = 0x4, offset = 0x4, fixed_abs, tag = 'smem constant byte address 0x4 - core index']
  #allocation1 [shape = 'u32[144,128]{1,0:T(1,128)}', space=vmem, size = 0x12000, scoped, tag = 'internal scratch']
  %s0 = inlined_call_operand.vmem [shape: f32[16,16], index: 0, kind: input, shape index: {}]
  %s1 = inlined_call_operand.vmem [shape: f32[16,8], index: 1, kind: input, shape index: {}]
  %s2 = inlined_call_operand.hbm [shape: f32[16,128], index: 2, kind: input, shape index: {}]
  %s3 = inlined_call_operand.hbm [shape: f32[16,128], index: 3, kind: output, shape index: {}]
  %s4 = sld [smem:[#allocation0]]
  $region49: #{tpu_custom_call.1} parent=0
    _
  %s6 = ssub.s32 1, %s4
  %s7 = scalar_select 0, %s6, %s4
  $region1: #{tpu_custom_call.1} parent=0
    #allocation2 [shape = 'u8[8192]{0}', space=vmem, size = 0x2000, scoped, tag = 'input window, operand 2, single buffered']
    #allocation3 [shape = 's32[2]{0}', space=sflag, size = 0x8, scoped, tag = 'scoped memory for tpu_custom_call.1']
    #allocation4 [shape = 's32[2]{0}', space=sflag, size = 0x8, scoped, tag = 'scoped memory for tpu_custom_call.1']
    #allocation5 [shape = 'u8[8192]{0}', space=vmem, size = 0x2000, scoped, tag = 'output window, operand 0']
    %8 = vsyncpa [#allocation3], 0
    %9 = vsyncpa [#allocation4], 0
    %s10 = scalar_lea.sflag [#allocation4], 1
    %11 = vsyncpa %s10, 0
    loop: start=0, step=1, limit=4
    $region2: #{tpu_custom_call.1} parent=1 // loop_pre_header
      _
    $region3: #{tpu_custom_call.1} parent=1 // loop_header
      %s13 = sphi 0, %s17
      %p14 = scmp.ge.s32.totalorder %s13, 4
      %s23 = sphi 0, %s25
      %s26 = sphi 0, %s23
      %s27 = sphi 0, %s26
      %s43 = sphi 0, %s27
      %s49 = sphi 0, %s51
      %s52 = sphi 0, %s49
      %s53 = sphi 0, %s52
      %s69 = sphi 0, %s53
      %s73 = sphi 0, %s73
      %s75 = sphi 0, %s73
      %s76 = sphi 0, %s75
      %s90 = sphi 0, %s76
      %s96 = sphi 0, %s98
      %s99 = sphi 0, %s96
      %s100 = sphi 0, %s99
      %s116 = sphi 0, %s100
    $region4: #{tpu_custom_call.1} parent=1 // loop_header_branch
      %16 = sbr.rel (%p14) target = $region8
    $region5: #{tpu_custom_call.1} parent=1 // loop_body
      %s18 = ssub.s32 %s13, 1
      %s19 = ssub.s32 %s13, 2
      %s20 = sadd.s32 %s13, 1
      %s21 = ssub.s32 %s13, %s20
      %p22 = scmp.eq.s32.totalorder %s21, 0
      %s24 = sadd.s32 %s23, 1
      %s25 = scalar_select %p22, %s23, %s24
      %p28 = pneg %p22
      %p29 = scmp.eq.s32.totalorder %s13, 1
      %p30 = por %p28, %p29
      %p31 = scmp.ne.s32.totalorder %s23, %s26
      %p32 = scmp.eq.s32.totalorder %s13, 0
      %p33 = por %p31, %p32
      %p34 = scmp.ne.s32.totalorder %s23, %s26
      %p35 = scmp.eq.s32.totalorder %s18, 1
      %p36 = por %p34, %p35
      %p37 = scmp.ne.s32.totalorder %s26, %s27
      %p38 = scmp.eq.s32.totalorder %s18, 0
      %p39 = por %p37, %p38
      %p40 = scmp.ne.s32.totalorder %s26, %s27
      %p41 = scmp.eq.s32.totalorder %s19, 1
      %p42 = por %p40, %p41
      %p44 = scmp.ne.s32.totalorder %s27, %s43
      %p45 = scmp.eq.s32.totalorder %s19, 0
      %p46 = por %p44, %p45
      %s47 = ssub.s32 %s13, %s20
      %p48 = scmp.eq.s32.totalorder %s47, 0
      %s50 = sadd.s32 %s49, 1
      %s51 = scalar_select %p48, %s49, %s50
      %p54 = pneg %p48
      %p55 = scmp.eq.s32.totalorder %s13, 1
      %p56 = por %p54, %p55
      %p57 = scmp.ne.s32.totalorder %s49, %s52
      %p58 = scmp.eq.s32.totalorder %s13, 0
      %p59 = por %p57, %p58
      %p60 = scmp.ne.s32.totalorder %s49, %s52
      %p61 = scmp.eq.s32.totalorder %s18, 1
      %p62 = por %p60, %p61
      %p63 = scmp.ne.s32.totalorder %s52, %s53
      %p64 = scmp.eq.s32.totalorder %s18, 0
      %p65 = por %p63, %p64
      %p66 = scmp.ne.s32.totalorder %s52, %s53
      %p67 = scmp.eq.s32.totalorder %s19, 1
      %p68 = por %p66, %p67
      %p70 = scmp.ne.s32.totalorder %s53, %s69
      %p71 = scmp.eq.s32.totalorder %s19, 0
      %p72 = por %p70, %p71
      %s74 = sadd.s32 %s73, 1
      %p77 = scmp.eq.s32.totalorder %s13, 1
      %p78 = scmp.ne.s32.totalorder %s73, %s75
      %p79 = scmp.eq.s32.totalorder %s13, 0
      %p80 = por %p78, %p79
      %p81 = scmp.ne.s32.totalorder %s73, %s75
      %p82 = scmp.eq.s32.totalorder %s18, 1
      %p83 = por %p81, %p82
      %p84 = scmp.ne.s32.totalorder %s75, %s76
      %p85 = scmp.eq.s32.totalorder %s18, 0
      %p86 = por %p84, %p85
      %p87 = scmp.ne.s32.totalorder %s75, %s76
      %p88 = scmp.eq.s32.totalorder %s19, 1
      %p89 = por %p87, %p88
      %p91 = scmp.ne.s32.totalorder %s76, %s90
      %p92 = scmp.eq.s32.totalorder %s19, 0
      %p93 = por %p91, %p92
      %s94 = ssub.s32 %s13, %s20
      %p95 = scmp.eq.s32.totalorder %s94, 0
      %s97 = sadd.s32 %s96, 1
      %s98 = scalar_select %p95, %s96, %s97
      %p101 = pneg %p95
      %p102 = scmp.eq.s32.totalorder %s13, 1
      %p103 = por %p101, %p102
      %p104 = scmp.ne.s32.totalorder %s96, %s99
      %p105 = scmp.eq.s32.totalorder %s13, 0
      %p106 = por %p104, %p105
      %p107 = scmp.ne.s32.totalorder %s96, %s99
      %p108 = scmp.eq.s32.totalorder %s18, 1
      %p109 = por %p107, %p108
      %p110 = scmp.ne.s32.totalorder %s99, %s100
      %p111 = scmp.eq.s32.totalorder %s18, 0
      %p112 = por %p110, %p111
      %p113 = scmp.ne.s32.totalorder %s99, %s100
      %p114 = scmp.eq.s32.totalorder %s19, 1
      %p115 = por %p113, %p114
      %p117 = scmp.ne.s32.totalorder %s100, %s116
      %p118 = scmp.eq.s32.totalorder %s19, 0
      %p119 = por %p117, %p118
      %p120 = scmp.le.s32.totalorder 1, %s13
      %p121 = scmp.lt.s32.totalorder %s13, 3
      %p122 = pnand %p120, %p121
      %p123 = pneg %p122
      // Predicated region
      $region9: #{tpu_custom_call.1} parent=5 // pred_check
        _
      $region10: #{tpu_custom_call.1} parent=5 // pred_check_branch
        %125 = sbr.rel (%p122) target = $region12
      $region11: #{tpu_custom_call.1} parent=5 // pred_region
        %s126 = ssub.s32 %s13, 1
        // Predicated region
        $region13: #{tpu_custom_call.1} parent=11 // pred_check
          %p127 = pneg %p86
        $region14: #{tpu_custom_call.1} parent=11 // pred_check_branch
          %129 = sbr.rel (%p127) target = $region16
        $region15: #{tpu_custom_call.1} parent=11 // pred_region
          %s131 = ssub.s32 256, 256
          %132 = vsyncadd [#allocation3], %s131
          %s133 = sshll.u32 [#allocation2], 4
          %s134 = int_to_ptr.vmem [resolvable:$true] %s133
          %139 = dma.hbm_to_vmem [thread:$0]  %s2, 256, %s134, [#allocation3], 128, 128, 8
        $region16: #{tpu_custom_call.1} parent=11 // pred_fallthru
          _
      $region12: #{tpu_custom_call.1} parent=5 // pred_fallthru
        _
      %p140 = scmp.lt.s32.totalorder %s13, 2
      // Predicated region
      $region17: #{tpu_custom_call.1} parent=5 // pred_check
        %p141 = pneg %p140
      $region18: #{tpu_custom_call.1} parent=5 // pred_check_branch
        %143 = sbr.rel (%p141) target = $region20
      $region19: #{tpu_custom_call.1} parent=5 // pred_region
        // Predicated region
        $region21: #{tpu_custom_call.1} parent=19 // pred_check
          %p144 = pneg %p33
        $region22: #{tpu_custom_call.1} parent=19 // pred_check_branch
          %146 = sbr.rel (%p144) target = $region24
        $region23: #{tpu_custom_call.1} parent=19 // pred_region
          %p147 = scmp.lt.s32.totalorder %s13, 1
          %s148 = scalar_select %p147, %s13, 1
          %s149 = smul.addr %s148, 8
          %s150 = scalar_lea.vmem %s0, %s149
        $region24: #{tpu_custom_call.1} parent=19 // pred_fallthru
          _
        // Predicated region
        $region25: #{tpu_custom_call.1} parent=19 // pred_check
          %p151 = pneg %p59
        $region26: #{tpu_custom_call.1} parent=19 // pred_check_branch
          %153 = sbr.rel (%p151) target = $region28
        $region27: #{tpu_custom_call.1} parent=19 // pred_region
          %p154 = scmp.lt.s32.totalorder %s13, 1
          %s155 = scalar_select %p154, %s13, 1
          %s156 = smul.addr %s155, 8
          %s157 = scalar_lea.vmem %s1, %s156
        $region28: #{tpu_custom_call.1} parent=19 // pred_fallthru
          _
      $region20: #{tpu_custom_call.1} parent=5 // pred_fallthru
        _
      %p158 = scmp.le.s32.totalorder 1, %s13
      %p159 = scmp.lt.s32.totalorder %s13, 3
      %p160 = pnand %p158, %p159
      %p161 = pneg %p160
      // Predicated region
      $region29: #{tpu_custom_call.1} parent=5 // pred_check
        _
      $region30: #{tpu_custom_call.1} parent=5 // pred_check_branch
        %163 = sbr.rel (%p160) target = $region32
      $region31: #{tpu_custom_call.1} parent=5 // pred_region
        %s164 = ssub.s32 %s13, 1
        // Predicated region
        $region33: #{tpu_custom_call.1} parent=31 // pred_check
          %p165 = pneg %p86
        $region34: #{tpu_custom_call.1} parent=31 // pred_check_branch
          %167 = sbr.rel (%p165) target = $region36
        $region35: #{tpu_custom_call.1} parent=31 // pred_region
          %168 = dma.done [#allocation3], 256
        $region36: #{tpu_custom_call.1} parent=31 // pred_fallthru
          _
        %p169 = scmp.lt.s32.totalorder %s18, 1
        %s170 = scalar_select %p169, %s18, 1
        %s171 = smul.addr %s170, 8
        %s172 = scalar_lea.vmem %s0, %s171
        %p173 = pneg %p39
        %p174 = pneg %p36
        %p175 = scmp.lt.s32.totalorder %s18, 1
        %s176 = scalar_select %p175, %s18, 1
        %s177 = smul.addr %s176, 8
        %s178 = scalar_lea.vmem %s1, %s177
        %p179 = pneg %p65
        %p180 = pneg %p62
        %p181 = pneg %p86
        %p182 = pneg %p83
        %p183 = pneg %p112
        %p184 = pneg %p109
        %s185 = sand.u32 %s99, 1
        %s186 = scalar_lea.sflag [#allocation4], %s185
        %s187 = sand.u32 %s99, 1
        %s188 = smul.addr %s187, 8
        %s189 = scalar_lea.vmem [#allocation5], %s188
        %p190 = scmp.lt.s32.totalorder %s18, 1
        %s191 = scalar_select %p190, %s18, 1
        %s192 = smul.addr %s191, 8
        %s193 = scalar_lea.vmem %s0, %s192
        %p194 = scmp.lt.s32.totalorder %s18, 1
        %s195 = scalar_select %p194, %s18, 1
        %s196 = smul.addr %s195, 8
        %s197 = scalar_lea.vmem %s1, %s196
        %v198 = vld [vmem:[%s193] sm:$0xff]
        %v199 = vld [vmem:[%s197] sm:$0xff]
        %vm200 = vcmask 64512
        %v202 = vsel %vm200, %v199, 0
        %204 = vmatprep.subr.mxu0 0.0
        %205 = vmatpush1.msra.mxu0 0.0
        %206 = vmatprep.subr.mxu0 0.0
        %207 = vmatpush1.msra.mxu0 0.0
        %208 = vmatprep.subr.mxu0 0.0
        %209 = vmatpush1.msra.mxu0 0.0
        %210 = vmatprep.subr.mxu0 0.0
        %211 = vmatpush1.msra.mxu0 0.0
        %212 = vmatprep.subr.mxu0 0.0
        %213 = vmatpush1.msra.mxu0 0.0
        %214 = vmatprep.subr.mxu0 0.0
        %215 = vmatpush1.msra.mxu0 0.0
        %216 = vmatprep.subr.mxu0 0.0
        %217 = vmatpush1.msra.mxu0 0.0
        %218 = vmatprep.subr.mxu0 0.0
        %219 = vmatpush1.msra.mxu0 0.0
        %220 = vmatprep.subr.mxu0 0.0
        %221 = vmatpush1.msra.mxu0 0.0
        %222 = vmatprep.subr.mxu0 0.0
        %223 = vmatpush1.msra.mxu0 0.0
        %224 = vmatprep.subr.mxu0 0.0
        %225 = vmatpush1.msra.mxu0 0.0
        %226 = vmatprep.subr.mxu0 0.0
        %227 = vmatpush1.msra.mxu0 0.0
        %228 = vmatprep.subr.mxu0 0.0
        %229 = vmatpush1.msra.mxu0 0.0
        %230 = vmatprep.subr.mxu0 0.0
        %231 = vmatpush1.msra.mxu0 0.0
        %232 = vmatprep.subr.mxu0 0.0
        %233 = vmatpush1.msra.mxu0 0.0
        %234 = vmatprep.subr.mxu0 0.0
        %235 = vmatpush1.msra.mxu0 %v198
        %236 = vmatprep.subr.mxu0 0.0
        %237 = vmatpush2.msra.mxu0 0.0
        %238 = vmatprep.subr.mxu0 0.0
        %239 = vmatpush2.msra.mxu0 0.0
        %240 = vmatprep.subr.mxu0 0.0
        %241 = vmatpush2.msra.mxu0 0.0
        %242 = vmatprep.subr.mxu0 0.0
        %243 = vmatpush2.msra.mxu0 0.0
        %244 = vmatprep.subr.mxu0 0.0
        %245 = vmatpush2.msra.mxu0 0.0
        %246 = vmatprep.subr.mxu0 0.0
        %247 = vmatpush2.msra.mxu0 0.0
        %248 = vmatprep.subr.mxu0 0.0
        %249 = vmatpush2.msra.mxu0 0.0
        %250 = vmatprep.subr.mxu0 0.0
        %251 = vmatpush2.msra.mxu0 0.0
        %252 = vmatprep.subr.mxu0 0.0
        %253 = vmatpush2.msra.mxu0 0.0
        %254 = vmatprep.subr.mxu0 0.0
        %255 = vmatpush2.msra.mxu0 0.0
        %256 = vmatprep.subr.mxu0 0.0
        %257 = vmatpush2.msra.mxu0 0.0
        %258 = vmatprep.subr.mxu0 0.0
        %259 = vmatpush2.msra.mxu0 0.0
        %260 = vmatprep.subr.mxu0 0.0
        %261 = vmatpush2.msra.mxu0 0.0
        %262 = vmatprep.subr.mxu0 0.0
        %263 = vmatpush2.msra.mxu0 0.0
        %264 = vmatprep.subr.mxu0 0.0
        %265 = vmatpush2.msra.mxu0 0.0
        %266 = vmatprep.subr.mxu0 0.0
        %267 = vmatpush2.msra.mxu0 0.0
        %268 = vmatprep.mubr.f32.mxu0 0.0
        %269 = vmatmul.mubr.f32.gmra.mxu0 %v202
        %v270 = vpop.f32.mrf.mxu0
        %v271 = vadd.f32 0.0, %v270
        %v272 = vpop.f32.mrf.mxu0
        %273 = vdwg.mxu0
        %v274 = vadd.f32 %v198, %v271
        %v275 = vld [vmem:[#allocation2] sm:$0xff]
        %v276 = vld [vmem:[#allocation2 + $0x8] sm:$0xff]
        %vm277 = vcmask 130048
        %v279 = vsel %vm277, %v274, 0
        %281 = vmatprep.subr.mxu0 0.0
        %282 = vmatpush1.msra.mxu0 0.0
        %283 = vmatprep.subr.mxu0 0.0
        %284 = vmatpush1.msra.mxu0 0.0
        %285 = vmatprep.subr.mxu0 0.0
        %286 = vmatpush1.msra.mxu0 0.0
        %287 = vmatprep.subr.mxu0 0.0
        %288 = vmatpush1.msra.mxu0 0.0
        %289 = vmatprep.subr.mxu0 0.0
        %290 = vmatpush1.msra.mxu0 0.0
        %291 = vmatprep.subr.mxu0 0.0
        %292 = vmatpush1.msra.mxu0 0.0
        %293 = vmatprep.subr.mxu0 0.0
        %294 = vmatpush1.msra.mxu0 0.0
        %295 = vmatprep.subr.mxu0 0.0
        %296 = vmatpush1.msra.mxu0 0.0
        %297 = vmatprep.subr.mxu0 0.0
        %298 = vmatpush1.msra.mxu0 0.0
        %299 = vmatprep.subr.mxu0 0.0
        %300 = vmatpush1.msra.mxu0 0.0
        %301 = vmatprep.subr.mxu0 0.0
        %302 = vmatpush1.msra.mxu0 0.0
        %303 = vmatprep.subr.mxu0 0.0
        %304 = vmatpush1.msra.mxu0 0.0
        %305 = vmatprep.subr.mxu0 0.0
        %306 = vmatpush1.msra.mxu0 0.0
        %307 = vmatprep.subr.mxu0 0.0
        %308 = vmatpush1.msra.mxu0 0.0
        %309 = vmatprep.subr.mxu0 0.0
        %310 = vmatpush1.msra.mxu0 %v276
        %311 = vmatprep.subr.mxu0 0.0
        %312 = vmatpush1.msra.mxu0 %v275
        %313 = vmatprep.subr.mxu0 0.0
        %314 = vmatpush2.msra.mxu0 0.0
        %315 = vmatprep.subr.mxu0 0.0
        %316 = vmatpush2.msra.mxu0 0.0
        %317 = vmatprep.subr.mxu0 0.0
        %318 = vmatpush2.msra.mxu0 0.0
        %319 = vmatprep.subr.mxu0 0.0
        %320 = vmatpush2.msra.mxu0 0.0
        %321 = vmatprep.subr.mxu0 0.0
        %322 = vmatpush2.msra.mxu0 0.0
        %323 = vmatprep.subr.mxu0 0.0
        %324 = vmatpush2.msra.mxu0 0.0
        %325 = vmatprep.subr.mxu0 0.0
        %326 = vmatpush2.msra.mxu0 0.0
        %327 = vmatprep.subr.mxu0 0.0
        %328 = vmatpush2.msra.mxu0 0.0
        %329 = vmatprep.subr.mxu0 0.0
        %330 = vmatpush2.msra.mxu0 0.0
        %331 = vmatprep.subr.mxu0 0.0
        %332 = vmatpush2.msra.mxu0 0.0
        %333 = vmatprep.subr.mxu0 0.0
        %334 = vmatpush2.msra.mxu0 0.0
        %335 = vmatprep.subr.mxu0 0.0
        %336 = vmatpush2.msra.mxu0 0.0
        %337 = vmatprep.subr.mxu0 0.0
        %338 = vmatpush2.msra.mxu0 0.0
        %339 = vmatprep.subr.mxu0 0.0
        %340 = vmatpush2.msra.mxu0 0.0
        %341 = vmatprep.subr.mxu0 0.0
        %342 = vmatpush2.msra.mxu0 0.0
        %343 = vmatprep.subr.mxu0 0.0
        %344 = vmatpush2.msra.mxu0 0.0
        %345 = vmatprep.mubr.f32.mxu0 0.0
        %346 = vmatmul.mubr.f32.gmra.mxu0 %v279
        %v347 = vpop.f32.mrf.mxu0
        %v348 = vadd.f32 0.0, %v347
        %v349 = vpop.f32.mrf.mxu0
        %350 = vdwg.mxu0
        %351 = vst [vmem:[%s189] sm:$0xff] %v348
        %s352 = sand.u32 %s99, 1
        %s353 = scalar_lea.sflag [#allocation4], %s352
        %s354 = sand.u32 %s99, 1
        %s355 = smul.addr %s354, 8
        %s356 = scalar_lea.vmem [#allocation5], %s355
        // Predicated region
        $region37: #{tpu_custom_call.1} parent=31 // pred_check
          %p357 = pneg %p109
        $region38: #{tpu_custom_call.1} parent=31 // pred_check_branch
          %359 = sbr.rel (%p357) target = $region40
        $region39: #{tpu_custom_call.1} parent=31 // pred_region
          %s361 = ssub.s32 128, 128
          %362 = vsyncadd %s353, %s361
          %s363 = smul.addr %s18, 128
          %s364 = scalar_lea.hbm %s3, %s363
          %s366 = sshll.u32 %s356, 4
          %s367 = int_to_ptr.vmem [resolvable:$true] %s366
          %369 = dma.vmem_to_hbm [thread:$0]  %s367, 128, %s364, %s353
        $region40: #{tpu_custom_call.1} parent=31 // pred_fallthru
          _
      $region32: #{tpu_custom_call.1} parent=5 // pred_fallthru
        _
      %p370 = scmp.le.s32.totalorder 2, %s13
      // Predicated region
      $region41: #{tpu_custom_call.1} parent=5 // pred_check
        %p371 = pneg %p370
      $region42: #{tpu_custom_call.1} parent=5 // pred_check_branch
        %373 = sbr.rel (%p371) target = $region44
      $region43: #{tpu_custom_call.1} parent=5 // pred_region
        %s374 = ssub.s32 %s13, 2
        // Predicated region
        $region45: #{tpu_custom_call.1} parent=43 // pred_check
          %p375 = pneg %p115
        $region46: #{tpu_custom_call.1} parent=43 // pred_check_branch
          %377 = sbr.rel (%p375) target = $region48
        $region47: #{tpu_custom_call.1} parent=43 // pred_region
          %s378 = sand.u32 %s100, 1
          %s379 = scalar_lea.sflag [#allocation4], %s378
          %s380 = sand.u32 %s100, 1
          %s381 = smul.addr %s380, 8
          %s382 = scalar_lea.vmem [#allocation5], %s381
          %383 = dma.done %s379, 128
        $region48: #{tpu_custom_call.1} parent=43 // pred_fallthru
          _
      $region44: #{tpu_custom_call.1} parent=5 // pred_fallthru
        _
    $region6: #{tpu_custom_call.1} parent=1 // loop_footer
      %s17 = sadd.s32 1, %s13
    $region7: #{tpu_custom_call.1} parent=1 // loop_footer_branch
      %12 = sbr.rel target = $region3
    $region8: #{tpu_custom_call.1} parent=1 // loop_exit
      _
    %384 = vsyncpa [#allocation3], 1
    %s385 = scalar_lea.sflag [#allocation3], 1
    %386 = vsyncpa %s385, 1
    %387 = vsyncpa [#allocation4], 1
    %s388 = scalar_lea.sflag [#allocation4], 1
    %389 = vsyncpa %s388, 1

</llo_original>
